<compile_context>
chip_gen: v7x
topology: tpu7x:2x2x1
jax: 0.10.0
libtpu: 0.0.40
codegen_flags: <defaults>
</compile_context>

<pallas_src>
import jax
import jax.numpy as jnp
from jax.experimental import pallas as pl
from jax.experimental.pallas import tpu as pltpu

# ---- problem sizes (small, consistent with the module) --------------------
SENT_LEN = 4          # sentence_length
BATCH = 2             # batch_size
MAX_WORD_LEN = 8      # max_word_length (must be >= KERNEL_SIZE)
CHAR_EMBED = 50       # self.char_embed_size
EMBED_SIZE = 32       # embed_size (word embedding size)
KERNEL_SIZE = 5       # CNN kernel_size
VOCAB_SIZE = 30       # len(vocab.char2id)
PAD_IDX = 0           # vocab.char2id['<pad>']

T_POOL = MAX_WORD_LEN - KERNEL_SIZE + 1    # conv output length (pool window) = 4
SB = SENT_LEN * BATCH                      # words processed together = 8


def _word_embed_kernel(ids_ref, emb_ref, wconv_ref, whw_ref, b_ref, o_ref):
    """Single invocation over all S*B words.

    ids_ref  : (L*S*B, 1) int32  char ids, rows ordered (l, s*B+b)
    emb_ref  : (V, C)     f32    char embedding table (pad row zeroed)
    wconv_ref: (K, C, E)  f32    conv weight (torch (E,C,K) transposed at init)
    whw_ref  : (E, 2E)    f32    fused highway weight [w_proj | w_gate]
    b_ref    : (1, 3E)    f32    packed biases [b_conv | b_proj | b_gate]
    o_ref    : (S*B, E)   f32
    """
    E = EMBED_SIZE

    # 1) Embedding gather as a one-hot matmul on the MXU (pad row is zero, so
    #    padding_idx semantics are preserved).
    ids = ids_ref[...]                                                  # (L*SB, 1)
    lane = jax.lax.broadcasted_iota(jnp.int32, (MAX_WORD_LEN * SB, VOCAB_SIZE), 1)
    one_hot = (ids == lane).astype(jnp.float32)                         # (64, V)
    char_emb = jnp.dot(one_hot, emb_ref[...],
                       preferred_element_type=jnp.float32)              # (64, C)

    # 2) Conv1d as K accumulated matmuls over sublane-aligned (multiple-of-8) row
    #    windows: window k contributes rows [k*SB : (k+T)*SB] of char_emb.
    conv = jnp.zeros((T_POOL * SB, E), jnp.float32)
    for k in range(KERNEL_SIZE):
        lhs = char_emb[k * SB:(k + T_POOL) * SB, :]                     # (32, C)
        conv = conv + jnp.dot(lhs, wconv_ref[k],
                              preferred_element_type=jnp.float32)       # (32, E)
    conv = jnp.maximum(conv + b_ref[:, 0:E], 0.0)                       # ReLU

    # 3) Max-pool over word positions: running max over T sublane slabs of SB rows.
    pooled = conv[0:SB, :]
    for t in range(1, T_POOL):
        pooled = jnp.maximum(pooled, conv[t * SB:(t + 1) * SB, :])      # (SB, E)

    # 4) Highway with fused (proj|gate) matmul, split in-registers.
    hw = jnp.dot(pooled, whw_ref[...],
                 preferred_element_type=jnp.float32) + b_ref[:, E:3 * E]  # (SB, 2E)
    proj = jnp.maximum(hw[:, 0:E], 0.0)
    gate = 1.0 / (1.0 + jnp.exp(-hw[:, E:2 * E]))                       # exact sigmoid
    x_highway = gate * proj + (1.0 - gate) * pooled

    # 5) Dropout(0.3) is identity at inference.
    o_ref[...] = x_highway.astype(o_ref.dtype)


@jax.jit
def model_embeddings_forward(input_ids, params):
    """input_ids: (sent_len, batch, max_word_len) int32 -> (sent_len, batch, embed_size) f32."""
    S, B, L = input_ids.shape
    # Tiny (256 B) layout plumbing: order ids (l, s, b) so in-kernel conv windows are
    # contiguous, sublane-aligned row slabs.
    ids_2d = jnp.transpose(input_ids, (2, 0, 1)).reshape(L * S * B, 1)

    vmem = pl.BlockSpec(memory_space=pltpu.MemorySpace.VMEM)
    out_flat = pl.pallas_call(
        _word_embed_kernel,
        out_shape=jax.ShapeDtypeStruct((S * B, EMBED_SIZE), jnp.float32),
        in_specs=[vmem] * 5,
        out_specs=vmem,
    )(ids_2d, params["emb_table"], params["w_conv"], params["w_hw"], params["b_all"])

    return out_flat.reshape(S, B, EMBED_SIZE)


def _reference_forward(input_ids, params):
    """Pure-JAX reference mirroring the PyTorch forward (eval mode)."""
    E = EMBED_SIZE
    x = jnp.take(params["emb_table"], input_ids, axis=0)               # (S, B, L, C)
    T = MAX_WORD_LEN - KERNEL_SIZE + 1
    windows = jnp.stack([x[:, :, k:k + T, :] for k in range(KERNEL_SIZE)], axis=3)
    conv = jnp.einsum("sbtkc,kce->sbte", windows, params["w_conv"]) + params["b_all"][0, :E]
    x_conv = jnp.max(jnp.maximum(conv, 0.0), axis=2)                   # (S, B, E)
    w_proj, w_gate = params["w_hw"][:, :E], params["w_hw"][:, E:]
    b_proj, b_gate = params["b_all"][0, E:2 * E], params["b_all"][0, 2 * E:]
    proj = jnp.maximum(x_conv @ w_proj + b_proj, 0.0)
    gate = jax.nn.sigmoid(x_conv @ w_gate + b_gate)
    return gate * proj + (1.0 - gate) * x_conv


def init_params(key):
    """All weight packing/transposes done ONCE here (hoisted out of the jitted forward)."""
    ks = jax.random.split(key, 7)
    emb = jax.random.normal(ks[0], (VOCAB_SIZE, CHAR_EMBED), jnp.float32) * 0.1
    emb = emb.at[PAD_IDX].set(0.0)                       # padding_idx row is zero
    # torch Conv1d weight is (E, C, K); store as (K, C, E) for the per-k matmuls.
    w_conv_t = jax.random.normal(ks[1], (EMBED_SIZE, CHAR_EMBED, KERNEL_SIZE), jnp.float32) * 0.05
    w_conv = jnp.transpose(w_conv_t, (2, 1, 0))
    b_conv = jax.random.normal(ks[2], (EMBED_SIZE,), jnp.float32) * 0.01
    w_proj = jax.random.normal(ks[3], (EMBED_SIZE, EMBED_SIZE), jnp.float32) * 0.05
    b_proj = jax.random.normal(ks[4], (EMBED_SIZE,), jnp.float32) * 0.01
    w_gate = jax.random.normal(ks[5], (EMBED_SIZE, EMBED_SIZE), jnp.float32) * 0.05
    b_gate = jax.random.normal(ks[6], (EMBED_SIZE,), jnp.float32) * 0.01
    return {
        "emb_table": emb,                                              # (V, C)
        "w_conv": w_conv,                                              # (K, C, E)
        "w_hw": jnp.concatenate([w_proj, w_gate], axis=1),             # (E, 2E)
        "b_all": jnp.concatenate([b_conv, b_proj, b_gate])[None, :],   # (1, 3E)
    }


if __name__ == "__main__":
    key = jax.random.PRNGKey(0)
    pkey, ikey = jax.random.split(key)
    params = init_params(pkey)
    input_ids = jax.random.randint(
        ikey, (SENT_LEN, BATCH, MAX_WORD_LEN), 0, VOCAB_SIZE, dtype=jnp.int32)

    out = model_embeddings_forward(input_ids, params)
    out = jax.block_until_ready(out)

    ref = _reference_forward(input_ids, params)
    assert out.shape == (SENT_LEN, BATCH, EMBED_SIZE)
    assert jnp.allclose(out, ref, atol=1e-4, rtol=1e-4), "mismatch vs reference"
    print("KERNEL_OK")
</pallas_src>

<mosaic_0001>
module attributes {stable_mosaic.version = 11 : i64} {
  func.func @_word_embed_kernel(%arg0: memref<64x1xi32, #tpu.memory_space<vmem>>, %arg1: memref<30x50xf32, #tpu.memory_space<vmem>>, %arg2: memref<5x50x32xf32, #tpu.memory_space<vmem>>, %arg3: memref<32x64xf32, #tpu.memory_space<vmem>>, %arg4: memref<1x96xf32, #tpu.memory_space<vmem>>, %arg5: memref<8x32xf32, #tpu.memory_space<vmem>>) attributes {dimension_semantics = [], scalar_prefetch = 0 : i64, scratch_operands = 0 : i64, tpu.core_type = #tpu.core_type<tc>} {
    %c0 = arith.constant 0 : index
    %c0_0 = arith.constant 0 : index
    %0 = vector.load %arg0[%c0, %c0_0] : memref<64x1xi32, #tpu.memory_space<vmem>>, vector<64x1xi32>
    %1 = tpu.iota {dimensions = array<i32: 1>} : vector<64x30xi32>
    %2 = vector.broadcast %0 : vector<64x1xi32> to vector<64x30xi32>
    %3 = arith.cmpi eq, %2, %1 : vector<64x30xi32>
    %4 = arith.extui %3 : vector<64x30xi1> to vector<64x30xi32>
    %5 = arith.sitofp %4 : vector<64x30xi32> to vector<64x30xf32>
    %c0_1 = arith.constant 0 : index
    %c0_2 = arith.constant 0 : index
    %6 = vector.load %arg1[%c0_1, %c0_2] : memref<30x50xf32, #tpu.memory_space<vmem>>, vector<30x50xf32>
    %cst = arith.constant dense<0.000000e+00> : vector<64x50xf32>
    %7 = tpu.matmul %5, %6, %cst {dimension_numbers = #tpu.dot_dimension_numbers<[1], [0], [0], [1], [0, 0, 1, 1], [], []>} : vector<64x30xf32>, vector<30x50xf32>, vector<64x50xf32> -> vector<64x50xf32>
    %cst_3 = arith.constant 0.000000e+00 : f32
    %8 = vector.broadcast %cst_3 : f32 to vector<32x32xf32>
    %9 = vector.extract_strided_slice %7 {offsets = [0, 0], sizes = [32, 50], strides = [1, 1]} : vector<64x50xf32> to vector<32x50xf32>
    %c0_4 = arith.constant 0 : index
    %c0_5 = arith.constant 0 : index
    %c0_6 = arith.constant 0 : index
    %10 = vector.load %arg2[%c0_4, %c0_5, %c0_6] : memref<5x50x32xf32, #tpu.memory_space<vmem>>, vector<1x50x32xf32>
    %11 = vector.shape_cast %10 : vector<1x50x32xf32> to vector<50x32xf32>
    %cst_7 = arith.constant dense<0.000000e+00> : vector<32x32xf32>
    %12 = tpu.matmul %9, %11, %cst_7 {dimension_numbers = #tpu.dot_dimension_numbers<[1], [0], [0], [1], [0, 0, 1, 1], [], []>} : vector<32x50xf32>, vector<50x32xf32>, vector<32x32xf32> -> vector<32x32xf32>
    %13 = arith.addf %8, %12 : vector<32x32xf32>
    %14 = vector.extract_strided_slice %7 {offsets = [8, 0], sizes = [32, 50], strides = [1, 1]} : vector<64x50xf32> to vector<32x50xf32>
    %c1 = arith.constant 1 : index
    %c0_8 = arith.constant 0 : index
    %c0_9 = arith.constant 0 : index
    %15 = vector.load %arg2[%c1, %c0_8, %c0_9] : memref<5x50x32xf32, #tpu.memory_space<vmem>>, vector<1x50x32xf32>
    %16 = vector.shape_cast %15 : vector<1x50x32xf32> to vector<50x32xf32>
    %cst_10 = arith.constant dense<0.000000e+00> : vector<32x32xf32>
    %17 = tpu.matmul %14, %16, %cst_10 {dimension_numbers = #tpu.dot_dimension_numbers<[1], [0], [0], [1], [0, 0, 1, 1], [], []>} : vector<32x50xf32>, vector<50x32xf32>, vector<32x32xf32> -> vector<32x32xf32>
    %18 = arith.addf %13, %17 : vector<32x32xf32>
    %19 = vector.extract_strided_slice %7 {offsets = [16, 0], sizes = [32, 50], strides = [1, 1]} : vector<64x50xf32> to vector<32x50xf32>
    %c2 = arith.constant 2 : index
    %c0_11 = arith.constant 0 : index
    %c0_12 = arith.constant 0 : index
    %20 = vector.load %arg2[%c2, %c0_11, %c0_12] : memref<5x50x32xf32, #tpu.memory_space<vmem>>, vector<1x50x32xf32>
    %21 = vector.shape_cast %20 : vector<1x50x32xf32> to vector<50x32xf32>
    %cst_13 = arith.constant dense<0.000000e+00> : vector<32x32xf32>
    %22 = tpu.matmul %19, %21, %cst_13 {dimension_numbers = #tpu.dot_dimension_numbers<[1], [0], [0], [1], [0, 0, 1, 1], [], []>} : vector<32x50xf32>, vector<50x32xf32>, vector<32x32xf32> -> vector<32x32xf32>
    %23 = arith.addf %18, %22 : vector<32x32xf32>
    %24 = vector.extract_strided_slice %7 {offsets = [24, 0], sizes = [32, 50], strides = [1, 1]} : vector<64x50xf32> to vector<32x50xf32>
    %c3 = arith.constant 3 : index
    %c0_14 = arith.constant 0 : index
    %c0_15 = arith.constant 0 : index
    %25 = vector.load %arg2[%c3, %c0_14, %c0_15] : memref<5x50x32xf32, #tpu.memory_space<vmem>>, vector<1x50x32xf32>
    %26 = vector.shape_cast %25 : vector<1x50x32xf32> to vector<50x32xf32>
    %cst_16 = arith.constant dense<0.000000e+00> : vector<32x32xf32>
    %27 = tpu.matmul %24, %26, %cst_16 {dimension_numbers = #tpu.dot_dimension_numbers<[1], [0], [0], [1], [0, 0, 1, 1], [], []>} : vector<32x50xf32>, vector<50x32xf32>, vector<32x32xf32> -> vector<32x32xf32>
    %28 = arith.addf %23, %27 : vector<32x32xf32>
    %29 = vector.extract_strided_slice %7 {offsets = [32, 0], sizes = [32, 50], strides = [1, 1]} : vector<64x50xf32> to vector<32x50xf32>
    %c4 = arith.constant 4 : index
    %c0_17 = arith.constant 0 : index
    %c0_18 = arith.constant 0 : index
    %30 = vector.load %arg2[%c4, %c0_17, %c0_18] : memref<5x50x32xf32, #tpu.memory_space<vmem>>, vector<1x50x32xf32>
    %31 = vector.shape_cast %30 : vector<1x50x32xf32> to vector<50x32xf32>
    %cst_19 = arith.constant dense<0.000000e+00> : vector<32x32xf32>
    %32 = tpu.matmul %29, %31, %cst_19 {dimension_numbers = #tpu.dot_dimension_numbers<[1], [0], [0], [1], [0, 0, 1, 1], [], []>} : vector<32x50xf32>, vector<50x32xf32>, vector<32x32xf32> -> vector<32x32xf32>
    %33 = arith.addf %28, %32 : vector<32x32xf32>
    %c0_20 = arith.constant 0 : index
    %c0_21 = arith.constant 0 : index
    %34 = vector.load %arg4[%c0_20, %c0_21] : memref<1x96xf32, #tpu.memory_space<vmem>>, vector<1x32xf32>
    %35 = vector.broadcast %34 : vector<1x32xf32> to vector<32x32xf32>
    %36 = arith.addf %33, %35 : vector<32x32xf32>
    %cst_22 = arith.constant 0.000000e+00 : f32
    %37 = vector.broadcast %cst_22 : f32 to vector<32x32xf32>
    %38 = arith.maximumf %36, %37 : vector<32x32xf32>
    %39 = vector.extract_strided_slice %38 {offsets = [0, 0], sizes = [8, 32], strides = [1, 1]} : vector<32x32xf32> to vector<8x32xf32>
    %40 = vector.extract_strided_slice %38 {offsets = [8, 0], sizes = [8, 32], strides = [1, 1]} : vector<32x32xf32> to vector<8x32xf32>
    %41 = arith.maximumf %39, %40 : vector<8x32xf32>
    %42 = vector.extract_strided_slice %38 {offsets = [16, 0], sizes = [8, 32], strides = [1, 1]} : vector<32x32xf32> to vector<8x32xf32>
    %43 = arith.maximumf %41, %42 : vector<8x32xf32>
    %44 = vector.extract_strided_slice %38 {offsets = [24, 0], sizes = [8, 32], strides = [1, 1]} : vector<32x32xf32> to vector<8x32xf32>
    %45 = arith.maximumf %43, %44 : vector<8x32xf32>
    %c0_23 = arith.constant 0 : index
    %c0_24 = arith.constant 0 : index
    %46 = vector.load %arg3[%c0_23, %c0_24] : memref<32x64xf32, #tpu.memory_space<vmem>>, vector<32x64xf32>
    %cst_25 = arith.constant dense<0.000000e+00> : vector<8x64xf32>
    %47 = tpu.matmul %45, %46, %cst_25 {dimension_numbers = #tpu.dot_dimension_numbers<[1], [0], [0], [1], [0, 0, 1, 1], [], []>} : vector<8x32xf32>, vector<32x64xf32>, vector<8x64xf32> -> vector<8x64xf32>
    %c0_26 = arith.constant 0 : index
    %c32 = arith.constant 32 : index
    %48 = vector.load %arg4[%c0_26, %c32] : memref<1x96xf32, #tpu.memory_space<vmem>>, vector<1x64xf32>
    %49 = vector.broadcast %48 : vector<1x64xf32> to vector<8x64xf32>
    %50 = arith.addf %47, %49 : vector<8x64xf32>
    %51 = vector.extract_strided_slice %50 {offsets = [0, 0], sizes = [8, 32], strides = [1, 1]} : vector<8x64xf32> to vector<8x32xf32>
    %cst_27 = arith.constant 0.000000e+00 : f32
    %52 = vector.broadcast %cst_27 : f32 to vector<8x32xf32>
    %53 = arith.maximumf %51, %52 : vector<8x32xf32>
    %54 = vector.extract_strided_slice %50 {offsets = [0, 32], sizes = [8, 32], strides = [1, 1]} : vector<8x64xf32> to vector<8x32xf32>
    %cst_28 = arith.constant 0.000000e+00 : f32
    %55 = vector.broadcast %cst_28 : f32 to vector<8x32xf32>
    %56 = arith.subf %55, %54 : vector<8x32xf32>
    %57 = math.exp %56 : vector<8x32xf32>
    %cst_29 = arith.constant 1.000000e+00 : f32
    %58 = vector.broadcast %cst_29 : f32 to vector<8x32xf32>
    %59 = arith.addf %58, %57 : vector<8x32xf32>
    %cst_30 = arith.constant 1.000000e+00 : f32
    %60 = vector.broadcast %cst_30 : f32 to vector<8x32xf32>
    %61 = arith.divf %60, %59 : vector<8x32xf32>
    %62 = arith.mulf %61, %53 : vector<8x32xf32>
    %cst_31 = arith.constant 1.000000e+00 : f32
    %63 = vector.broadcast %cst_31 : f32 to vector<8x32xf32>
    %64 = arith.subf %63, %61 : vector<8x32xf32>
    %65 = arith.mulf %64, %45 : vector<8x32xf32>
    %66 = arith.addf %62, %65 : vector<8x32xf32>
    %c0_32 = arith.constant 0 : index
    %c0_33 = arith.constant 0 : index
    %67 = vector.load %arg5[%c0_32, %c0_33] : memref<8x32xf32, #tpu.memory_space<vmem>>, vector<8x32xf32>
    tpu.vector_store %arg5[%c0_32, %c0_33], %66 {strides = array<i32>} : memref<8x32xf32, #tpu.memory_space<vmem>>, vector<8x32xf32>,
    return
  }
}

</mosaic_0001>

<llo_original>
// kernel: model_embeddings_forward.1
$region0: #{model_embeddings_forward.1}
  #allocation0 [shape = 'u32[]', space=smem, size = 0x4, offset = 0x4, fixed_abs, tag = 'smem constant byte address 0x4 - core index']
  #allocation1 [shape = 'u32[144,128]{1,0:T(1,128)}', space=vmem, size = 0x12000, scoped, tag = 'internal scratch']
  %s0 = inlined_call_operand.vmem [shape: s32[64,1], index: 0, kind: input, shape index: {}]
  %s1 = inlined_call_operand.vmem [shape: f32[30,50], index: 1, kind: input, shape index: {}]
  %s2 = inlined_call_operand.vmem [shape: f32[5,50,32], index: 2, kind: input, shape index: {}]
  %s3 = inlined_call_operand.vmem [shape: f32[32,64], index: 3, kind: input, shape index: {}]
  %s4 = inlined_call_operand.vmem [shape: f32[1,96], index: 4, kind: input, shape index: {}]
  %s5 = inlined_call_operand.hbm [shape: f32[8,32], index: 5, kind: output, shape index: {}]
  %s6 = sld [smem:[#allocation0]]
  $region30: #{model_embeddings_forward.1} parent=0
    _
  %s8 = ssub.s32 1, %s6
  %s9 = scalar_select 0, %s8, %s6
  $region1: #{model_embeddings_forward.1} parent=0
    #allocation2 [shape = 'u8[4096]{0}', space=vmem, size = 0x1000, scoped, tag = 'output window, operand 0, single buffered']
    #allocation3 [shape = 's32[1]{0}', space=sflag, size = 0x4, scoped, tag = 'scoped memory for model_embeddings_forward.1']
    %10 = vsyncpa [#allocation3], 0
    // Predicated region
    $region2: #{model_embeddings_forward.1} parent=1 // pred_check
      _
    $region3: #{model_embeddings_forward.1} parent=1 // pred_check_branch
      %12 = sbr.rel (0) target = $region5
    $region4: #{model_embeddings_forward.1} parent=1 // pred_region
      _
    $region5: #{model_embeddings_forward.1} parent=1 // pred_fallthru
      _
    // Predicated region
    $region6: #{model_embeddings_forward.1} parent=1 // pred_check
      _
    $region7: #{model_embeddings_forward.1} parent=1 // pred_check_branch
      %14 = sbr.rel (0) target = $region9
    $region8: #{model_embeddings_forward.1} parent=1 // pred_region
      _
    $region9: #{model_embeddings_forward.1} parent=1 // pred_fallthru
      _
    // Predicated region
    $region10: #{model_embeddings_forward.1} parent=1 // pred_check
      _
    $region11: #{model_embeddings_forward.1} parent=1 // pred_check_branch
      %16 = sbr.rel (0) target = $region13
    $region12: #{model_embeddings_forward.1} parent=1 // pred_region
      _
    $region13: #{model_embeddings_forward.1} parent=1 // pred_fallthru
      _
    // Predicated region
    $region14: #{model_embeddings_forward.1} parent=1 // pred_check
      _
    $region15: #{model_embeddings_forward.1} parent=1 // pred_check_branch
      %18 = sbr.rel (0) target = $region17
    $region16: #{model_embeddings_forward.1} parent=1 // pred_region
      _
    $region17: #{model_embeddings_forward.1} parent=1 // pred_fallthru
      _
    // Predicated region
    $region18: #{model_embeddings_forward.1} parent=1 // pred_check
      _
    $region19: #{model_embeddings_forward.1} parent=1 // pred_check_branch
      %20 = sbr.rel (0) target = $region21
    $region20: #{model_embeddings_forward.1} parent=1 // pred_region
      _
    $region21: #{model_embeddings_forward.1} parent=1 // pred_fallthru
      _
    %v21 = vld [vmem:[%s0] sm:$0xff]
    %v22 = vld [vmem:[%s0 + $0x8] sm:$0xff]
    %v23 = vld [vmem:[%s0 + $0x10] sm:$0xff]
    %v24 = vld [vmem:[%s0 + $0x18] sm:$0xff]
    %v25 = vld [vmem:[%s0 + $0x20] sm:$0xff]
    %v26 = vld [vmem:[%s0 + $0x28] sm:$0xff]
    %v27 = vld [vmem:[%s0 + $0x30] sm:$0xff]
    %v28 = vld [vmem:[%s0 + $0x38] sm:$0xff]
    %v29 = vlaneseq
    %v30 = vand.u32 %v29, 127
    %31 = vset.pattern.permute.xlu0 0
    %32 = vperm.xlu0 %31, %v21
    %v33 = vpop.permute.xlu0 %32
    %34 = vset.pattern.permute.xlu0 0
    %35 = vperm.xlu0 %34, %v22
    %v36 = vpop.permute.xlu0 %35
    %37 = vset.pattern.permute.xlu0 0
    %38 = vperm.xlu0 %37, %v23
    %v39 = vpop.permute.xlu0 %38
    %40 = vset.pattern.permute.xlu0 0
    %41 = vperm.xlu0 %40, %v24
    %v42 = vpop.permute.xlu0 %41
    %43 = vset.pattern.permute.xlu0 0
    %44 = vperm.xlu0 %43, %v25
    %v45 = vpop.permute.xlu0 %44
    %46 = vset.pattern.permute.xlu0 0
    %47 = vperm.xlu0 %46, %v26
    %v48 = vpop.permute.xlu0 %47
    %49 = vset.pattern.permute.xlu0 0
    %50 = vperm.xlu0 %49, %v27
    %v51 = vpop.permute.xlu0 %50
    %52 = vset.pattern.permute.xlu0 0
    %53 = vperm.xlu0 %52, %v28
    %v54 = vpop.permute.xlu0 %53
    %vm55 = vcmp.eq.s32.totalorder %v33, %v30
    %vm56 = vcmp.eq.s32.totalorder %v36, %v30
    %vm57 = vcmp.eq.s32.totalorder %v39, %v30
    %vm58 = vcmp.eq.s32.totalorder %v42, %v30
    %vm59 = vcmp.eq.s32.totalorder %v45, %v30
    %vm60 = vcmp.eq.s32.totalorder %v48, %v30
    %vm61 = vcmp.eq.s32.totalorder %v51, %v30
    %vm62 = vcmp.eq.s32.totalorder %v54, %v30
    %v63 = vsel %vm55, 1, 0
    %v64 = vsel %vm56, 1, 0
    %v65 = vsel %vm57, 1, 0
    %v66 = vsel %vm58, 1, 0
    %v67 = vsel %vm59, 1, 0
    %v68 = vsel %vm60, 1, 0
    %v69 = vsel %vm61, 1, 0
    %v70 = vsel %vm62, 1, 0
    %v71 = vcvt.s32.f32 %v63
    %v72 = vcvt.s32.f32 %v64
    %v73 = vcvt.s32.f32 %v65
    %v74 = vcvt.s32.f32 %v66
    %v75 = vcvt.s32.f32 %v67
    %v76 = vcvt.s32.f32 %v68
    %v77 = vcvt.s32.f32 %v69
    %v78 = vcvt.s32.f32 %v70
    %v79 = vld [vmem:[%s1] sm:$0xff]
    %v80 = vld [vmem:[%s1 + $0x8] sm:$0xff]
    %v81 = vld [vmem:[%s1 + $0x10] sm:$0xff]
    %v82 = vld [vmem:[%s1 + $0x18] sm:$0x3f]
    %vm83 = vcmask 244736
    %v85 = vsel %vm83, %v71, 0
    %v88 = vsel %vm83, %v72, 0
    %v91 = vsel %vm83, %v73, 0
    %v94 = vsel %vm83, %v74, 0
    %v97 = vsel %vm83, %v75, 0
    %v100 = vsel %vm83, %v76, 0
    %v103 = vsel %vm83, %v77, 0
    %v106 = vsel %vm83, %v78, 0
    %vm108 = vcmask 1045504
    %v110 = vsel %vm108, %v82, 0
    %112 = vmatprep.subr.mxu0 0.0
    %113 = vmatpush1.msra.mxu0 %v79
    %114 = vmatprep.subr.mxu0 0.0
    %115 = vmatpush1.msra.mxu0 %v80
    %116 = vmatprep.subr.mxu0 0.0
    %117 = vmatpush1.msra.mxu0 %v81
    %118 = vmatprep.subr.mxu0 0.0
    %119 = vmatpush1.msra.mxu0 %v110
    %120 = vmatprep.subr.mxu0 0.0
    %121 = vmatpush1.msra.mxu0 0.0
    %122 = vmatprep.subr.mxu0 0.0
    %123 = vmatpush1.msra.mxu0 0.0
    %124 = vmatprep.subr.mxu0 0.0
    %125 = vmatpush1.msra.mxu0 0.0
    %126 = vmatprep.subr.mxu0 0.0
    %127 = vmatpush1.msra.mxu0 0.0
    %128 = vmatprep.subr.mxu0 0.0
    %129 = vmatpush1.msra.mxu0 0.0
    %130 = vmatprep.subr.mxu0 0.0
    %131 = vmatpush1.msra.mxu0 0.0
    %132 = vmatprep.subr.mxu0 0.0
    %133 = vmatpush1.msra.mxu0 0.0
    %134 = vmatprep.subr.mxu0 0.0
    %135 = vmatpush1.msra.mxu0 0.0
    %136 = vmatprep.subr.mxu0 0.0
    %137 = vmatpush1.msra.mxu0 0.0
    %138 = vmatprep.subr.mxu0 0.0
    %139 = vmatpush1.msra.mxu0 0.0
    %140 = vmatprep.subr.mxu0 0.0
    %141 = vmatpush1.msra.mxu0 0.0
    %142 = vmatprep.subr.mxu0 0.0
    %143 = vmatpush1.msra.mxu0 0.0
    %144 = vmatprep.subr.mxu0 0.0
    %145 = vmatpush1.msra.mxu0 0.0
    %146 = vmatprep.subr.mxu0 0.0
    %147 = vmatpush1.msra.mxu0 0.0
    %148 = vmatprep.subr.mxu0 0.0
    %149 = vmatpush1.msra.mxu0 0.0
    %150 = vmatprep.subr.mxu0 0.0
    %151 = vmatpush1.msra.mxu0 0.0
    %152 = vmatprep.subr.mxu0 0.0
    %153 = vmatpush1.msra.mxu0 0.0
    %154 = vmatprep.subr.mxu0 0.0
    %155 = vmatpush1.msra.mxu0 0.0
    %156 = vmatprep.subr.mxu0 0.0
    %157 = vmatpush1.msra.mxu0 0.0
    %158 = vmatprep.subr.mxu0 0.0
    %159 = vmatpush1.msra.mxu0 0.0
    %160 = vmatprep.subr.mxu0 0.0
    %161 = vmatpush1.msra.mxu0 0.0
    %162 = vmatprep.subr.mxu0 0.0
    %163 = vmatpush1.msra.mxu0 0.0
    %164 = vmatprep.subr.mxu0 0.0
    %165 = vmatpush1.msra.mxu0 0.0
    %166 = vmatprep.subr.mxu0 0.0
    %167 = vmatpush1.msra.mxu0 0.0
    %168 = vmatprep.subr.mxu0 0.0
    %169 = vmatpush1.msra.mxu0 0.0
    %170 = vmatprep.subr.mxu0 0.0
    %171 = vmatpush1.msra.mxu0 0.0
    %172 = vmatprep.subr.mxu0 0.0
    %173 = vmatpush1.msra.mxu0 0.0
    %174 = vmatprep.subr.mxu0 0.0
    %175 = vmatpush1.msra.mxu0 0.0
    %176 = vmatprep.mubr.f32.mxu0 0.0
    %177 = vmatmul.mubr.f32.gmra.mrb[0].mxu0 %v85
    %v178 = vpop.f32.mrb[0].mxu0
    %v179 = vadd.f32 0.0, %v178
    %v180 = vpop.f32.mrb[0].mxu0
    %181 = vmatprep.mubr.f32.mxu0 0.0
    %182 = vmatmul.mubr.f32.gmra.mrb[0].mxu0 %v88
    %v183 = vpop.f32.mrb[0].mxu0
    %v184 = vadd.f32 0.0, %v183
    %v185 = vpop.f32.mrb[0].mxu0
    %186 = vmatprep.mubr.f32.mxu0 0.0
    %187 = vmatmul.mubr.f32.gmra.mrb[0].mxu0 %v91
    %v188 = vpop.f32.mrb[0].mxu0
    %v189 = vadd.f32 0.0, %v188
    %v190 = vpop.f32.mrb[0].mxu0
    %191 = vmatprep.mubr.f32.mxu0 0.0
    %192 = vmatmul.mubr.f32.gmra.mrb[0].mxu0 %v94
    %v193 = vpop.f32.mrb[0].mxu0
    %v194 = vadd.f32 0.0, %v193
    %v195 = vpop.f32.mrb[0].mxu0
    %196 = vmatprep.mubr.f32.mxu0 0.0
    %197 = vmatmul.mubr.f32.gmra.mrb[0].mxu0 %v97
    %v198 = vpop.f32.mrb[0].mxu0
    %v199 = vadd.f32 0.0, %v198
    %v200 = vpop.f32.mrb[0].mxu0
    %201 = vmatprep.mubr.f32.mxu0 0.0
    %202 = vmatmul.mubr.f32.gmra.mrb[0].mxu0 %v100
    %v203 = vpop.f32.mrb[0].mxu0
    %v204 = vadd.f32 0.0, %v203
    %v205 = vpop.f32.mrb[0].mxu0
    %206 = vmatprep.mubr.f32.mxu0 0.0
    %207 = vmatmul.mubr.f32.gmra.mrb[0].mxu0 %v103
    %v208 = vpop.f32.mrb[0].mxu0
    %v209 = vadd.f32 0.0, %v208
    %v210 = vpop.f32.mrb[0].mxu0
    %211 = vmatprep.mubr.f32.mxu0 0.0
    %212 = vmatmul.mubr.f32.gmra.mrb[0].mxu0 %v106
    %v213 = vpop.f32.mrb[0].mxu0
    %v214 = vadd.f32 0.0, %v213
    %v215 = vpop.f32.mrb[0].mxu0
    %216 = vdwg.mxu0
    %v217 = vld [vmem:[%s2] sm:$0xff]
    %v218 = vld [vmem:[%s2 + $0x8] sm:$0xff]
    %v219 = vld [vmem:[%s2 + $0x10] sm:$0xff]
    %v220 = vld [vmem:[%s2 + $0x18] sm:$0xff]
    %v221 = vld [vmem:[%s2 + $0x20] sm:$0xff]
    %v222 = vld [vmem:[%s2 + $0x28] sm:$0xff]
    %v223 = vld [vmem:[%s2 + $0x30] sm:$0x3]
    %s224 = scalar_lea.vmem %s2, 56
    %v225 = vld [vmem:[%s224] sm:$0xff]
    %v226 = vld [vmem:[%s224 + $0x8] sm:$0xff]
    %v227 = vld [vmem:[%s224 + $0x10] sm:$0xff]
    %v228 = vld [vmem:[%s224 + $0x18] sm:$0xff]
    %v229 = vld [vmem:[%s224 + $0x20] sm:$0xff]
    %v230 = vld [vmem:[%s224 + $0x28] sm:$0xff]
    %v231 = vld [vmem:[%s224 + $0x30] sm:$0x3]
    %vm232 = vcmask 408576
    %v234 = vsel %vm232, %v184, 0
    %v237 = vsel %vm232, %v189, 0
    %v240 = vsel %vm232, %v194, 0
    %v243 = vsel %vm232, %v199, 0
    %vm245 = vcmask 1041408
    %v247 = vsel %vm245, %v231, 0
    %249 = vmatprep.subr.mxu0 0.0
    %250 = vmatpush1.msra.mxu0 %v225
    %251 = vmatprep.subr.mxu0 0.0
    %252 = vmatpush1.msra.mxu0 %v226
    %253 = vmatprep.subr.mxu0 0.0
    %254 = vmatpush1.msra.mxu0 %v227
    %255 = vmatprep.subr.mxu0 0.0
    %256 = vmatpush1.msra.mxu0 %v228
    %257 = vmatprep.subr.mxu0 0.0
    %258 = vmatpush1.msra.mxu0 %v229
    %259 = vmatprep.subr.mxu0 0.0
    %260 = vmatpush1.msra.mxu0 %v230
    %261 = vmatprep.subr.mxu0 0.0
    %262 = vmatpush1.msra.mxu0 %v247
    %263 = vmatprep.subr.mxu0 0.0
    %264 = vmatpush1.msra.mxu0 0.0
    %265 = vmatprep.subr.mxu0 0.0
    %266 = vmatpush1.msra.mxu0 0.0
    %267 = vmatprep.subr.mxu0 0.0
    %268 = vmatpush1.msra.mxu0 0.0
    %269 = vmatprep.subr.mxu0 0.0
    %270 = vmatpush1.msra.mxu0 0.0
    %271 = vmatprep.subr.mxu0 0.0
    %272 = vmatpush1.msra.mxu0 0.0
    %273 = vmatprep.subr.mxu0 0.0
    %274 = vmatpush1.msra.mxu0 0.0
    %275 = vmatprep.subr.mxu0 0.0
    %276 = vmatpush1.msra.mxu0 0.0
    %277 = vmatprep.subr.mxu0 0.0
    %278 = vmatpush1.msra.mxu0 0.0
    %279 = vmatprep.subr.mxu0 0.0
    %280 = vmatpush1.msra.mxu0 0.0
    %281 = vmatprep.subr.mxu0 0.0
    %282 = vmatpush1.msra.mxu0 0.0
    %283 = vmatprep.subr.mxu0 0.0
    %284 = vmatpush1.msra.mxu0 0.0
    %285 = vmatprep.subr.mxu0 0.0
    %286 = vmatpush1.msra.mxu0 0.0
    %287 = vmatprep.subr.mxu0 0.0
    %288 = vmatpush1.msra.mxu0 0.0
    %289 = vmatprep.subr.mxu0 0.0
    %290 = vmatpush1.msra.mxu0 0.0
    %291 = vmatprep.subr.mxu0 0.0
    %292 = vmatpush1.msra.mxu0 0.0
    %293 = vmatprep.subr.mxu0 0.0
    %294 = vmatpush1.msra.mxu0 0.0
    %295 = vmatprep.subr.mxu0 0.0
    %296 = vmatpush1.msra.mxu0 0.0
    %297 = vmatprep.subr.mxu0 0.0
    %298 = vmatpush1.msra.mxu0 0.0
    %299 = vmatprep.subr.mxu0 0.0
    %300 = vmatpush1.msra.mxu0 0.0
    %301 = vmatprep.subr.mxu0 0.0
    %302 = vmatpush1.msra.mxu0 0.0
    %303 = vmatprep.subr.mxu0 0.0
    %304 = vmatpush1.msra.mxu0 0.0
    %305 = vmatprep.subr.mxu0 0.0
    %306 = vmatpush1.msra.mxu0 0.0
    %307 = vmatprep.subr.mxu0 0.0
    %308 = vmatpush1.msra.mxu0 0.0
    %309 = vmatprep.subr.mxu0 0.0
    %310 = vmatpush1.msra.mxu0 0.0
    %311 = vmatprep.subr.mxu0 0.0
    %312 = vmatpush1.msra.mxu0 0.0
    %313 = vmatprep.mubr.f32.mxu0 0.0
    %314 = vmatmul.mubr.f32.gmra.mrb[0].mxu0 %v234
    %v315 = vpop.f32.mrb[0].mxu0
    %v316 = vadd.f32 0.0, %v315
    %v317 = vpop.f32.mrb[0].mxu0
    %318 = vmatprep.mubr.f32.mxu0 0.0
    %319 = vmatmul.mubr.f32.gmra.mrb[0].mxu0 %v237
    %v320 = vpop.f32.mrb[0].mxu0
    %v321 = vadd.f32 0.0, %v320
    %v322 = vpop.f32.mrb[0].mxu0
    %323 = vmatprep.mubr.f32.mxu0 0.0
    %324 = vmatmul.mubr.f32.gmra.mrb[0].mxu0 %v240
    %v325 = vpop.f32.mrb[0].mxu0
    %v326 = vadd.f32 0.0, %v325
    %v327 = vpop.f32.mrb[0].mxu0
    %328 = vmatprep.mubr.f32.mxu0 0.0
    %329 = vmatmul.mubr.f32.gmra.mrb[0].mxu0 %v243
    %v330 = vpop.f32.mrb[0].mxu0
    %v331 = vadd.f32 0.0, %v330
    %v332 = vpop.f32.mrb[0].mxu0
    %333 = vdwg.mxu0
    %v335 = vsel %vm232, %v179, 0
    %v338 = vsel %vm245, %v223, 0
    %340 = vmatprep.subr.mxu0 0.0
    %341 = vmatpush1.msra.mxu0 %v217
    %342 = vmatprep.subr.mxu0 0.0
    %343 = vmatpush1.msra.mxu0 %v218
    %344 = vmatprep.subr.mxu0 0.0
    %345 = vmatpush1.msra.mxu0 %v219
    %346 = vmatprep.subr.mxu0 0.0
    %347 = vmatpush1.msra.mxu0 %v220
    %348 = vmatprep.subr.mxu0 0.0
    %349 = vmatpush1.msra.mxu0 %v221
    %350 = vmatprep.subr.mxu0 0.0
    %351 = vmatpush1.msra.mxu0 %v222
    %352 = vmatprep.subr.mxu0 0.0
    %353 = vmatpush1.msra.mxu0 %v338
    %354 = vmatprep.subr.mxu0 0.0
    %355 = vmatpush1.msra.mxu0 0.0
    %356 = vmatprep.subr.mxu0 0.0
    %357 = vmatpush1.msra.mxu0 0.0
    %358 = vmatprep.subr.mxu0 0.0
    %359 = vmatpush1.msra.mxu0 0.0
    %360 = vmatprep.subr.mxu0 0.0
    %361 = vmatpush1.msra.mxu0 0.0
    %362 = vmatprep.subr.mxu0 0.0
    %363 = vmatpush1.msra.mxu0 0.0
    %364 = vmatprep.subr.mxu0 0.0
    %365 = vmatpush1.msra.mxu0 0.0
    %366 = vmatprep.subr.mxu0 0.0
    %367 = vmatpush1.msra.mxu0 0.0
    %368 = vmatprep.subr.mxu0 0.0
    %369 = vmatpush1.msra.mxu0 0.0
    %370 = vmatprep.subr.mxu0 0.0
    %371 = vmatpush1.msra.mxu0 0.0
    %372 = vmatprep.subr.mxu0 0.0
    %373 = vmatpush1.msra.mxu0 0.0
    %374 = vmatprep.subr.mxu0 0.0
    %375 = vmatpush1.msra.mxu0 0.0
    %376 = vmatprep.subr.mxu0 0.0
    %377 = vmatpush1.msra.mxu0 0.0
    %378 = vmatprep.subr.mxu0 0.0
    %379 = vmatpush1.msra.mxu0 0.0
    %380 = vmatprep.subr.mxu0 0.0
    %381 = vmatpush1.msra.mxu0 0.0
    %382 = vmatprep.subr.mxu0 0.0
    %383 = vmatpush1.msra.mxu0 0.0
    %384 = vmatprep.subr.mxu0 0.0
    %385 = vmatpush1.msra.mxu0 0.0
    %386 = vmatprep.subr.mxu0 0.0
    %387 = vmatpush1.msra.mxu0 0.0
    %388 = vmatprep.subr.mxu0 0.0
    %389 = vmatpush1.msra.mxu0 0.0
    %390 = vmatprep.subr.mxu0 0.0
    %391 = vmatpush1.msra.mxu0 0.0
    %392 = vmatprep.subr.mxu0 0.0
    %393 = vmatpush1.msra.mxu0 0.0
    %394 = vmatprep.subr.mxu0 0.0
    %395 = vmatpush1.msra.mxu0 0.0
    %396 = vmatprep.subr.mxu0 0.0
    %397 = vmatpush1.msra.mxu0 0.0
    %398 = vmatprep.subr.mxu0 0.0
    %399 = vmatpush1.msra.mxu0 0.0
    %400 = vmatprep.subr.mxu0 0.0
    %401 = vmatpush1.msra.mxu0 0.0
    %402 = vmatprep.subr.mxu0 0.0
    %403 = vmatpush1.msra.mxu0 0.0
    %404 = vmatprep.mubr.f32.mxu0 0.0
    %405 = vmatmul.mubr.f32.gmra.mrb[0].mxu0 %v335
    %v406 = vpop.f32.mrb[0].mxu0
    %v407 = vadd.f32 %v316, %v406
    %v408 = vpop.f32.mrb[0].mxu0
    %409 = vmatprep.mubr.f32.mxu0 0.0
    %410 = vmatmul.mubr.f32.gmra.mrb[0].mxu0 %v234
    %v411 = vpop.f32.mrb[0].mxu0
    %v412 = vadd.f32 %v321, %v411
    %v413 = vpop.f32.mrb[0].mxu0
    %414 = vmatprep.mubr.f32.mxu0 0.0
    %415 = vmatmul.mubr.f32.gmra.mrb[0].mxu0 %v237
    %v416 = vpop.f32.mrb[0].mxu0
    %v417 = vadd.f32 %v326, %v416
    %v418 = vpop.f32.mrb[0].mxu0
    %419 = vmatprep.mubr.f32.mxu0 0.0
    %420 = vmatmul.mubr.f32.gmra.mrb[0].mxu0 %v240
    %v421 = vpop.f32.mrb[0].mxu0
    %v422 = vadd.f32 %v331, %v421
    %v423 = vpop.f32.mrb[0].mxu0
    %424 = vdwg.mxu0
    %s425 = scalar_lea.vmem %s2, 112
    %v426 = vld [vmem:[%s425] sm:$0xff]
    %v427 = vld [vmem:[%s425 + $0x8] sm:$0xff]
    %v428 = vld [vmem:[%s425 + $0x10] sm:$0xff]
    %v429 = vld [vmem:[%s425 + $0x18] sm:$0xff]
    %v430 = vld [vmem:[%s425 + $0x20] sm:$0xff]
    %v431 = vld [vmem:[%s425 + $0x28] sm:$0xff]
    %v432 = vld [vmem:[%s425 + $0x30] sm:$0x3]
    %v434 = vsel %vm232, %v204, 0
    %v437 = vsel %vm245, %v432, 0
    %439 = vmatprep.subr.mxu0 0.0
    %440 = vmatpush1.msra.mxu0 %v426
    %441 = vmatprep.subr.mxu0 0.0
    %442 = vmatpush1.msra.mxu0 %v427
    %443 = vmatprep.subr.mxu0 0.0
    %444 = vmatpush1.msra.mxu0 %v428
    %445 = vmatprep.subr.mxu0 0.0
    %446 = vmatpush1.msra.mxu0 %v429
    %447 = vmatprep.subr.mxu0 0.0
    %448 = vmatpush1.msra.mxu0 %v430
    %449 = vmatprep.subr.mxu0 0.0
    %450 = vmatpush1.msra.mxu0 %v431
    %451 = vmatprep.subr.mxu0 0.0
    %452 = vmatpush1.msra.mxu0 %v437
    %453 = vmatprep.subr.mxu0 0.0
    %454 = vmatpush1.msra.mxu0 0.0
    %455 = vmatprep.subr.mxu0 0.0
    %456 = vmatpush1.msra.mxu0 0.0
    %457 = vmatprep.subr.mxu0 0.0
    %458 = vmatpush1.msra.mxu0 0.0
    %459 = vmatprep.subr.mxu0 0.0
    %460 = vmatpush1.msra.mxu0 0.0
    %461 = vmatprep.subr.mxu0 0.0
    %462 = vmatpush1.msra.mxu0 0.0
    %463 = vmatprep.subr.mxu0 0.0
    %464 = vmatpush1.msra.mxu0 0.0
    %465 = vmatprep.subr.mxu0 0.0
    %466 = vmatpush1.msra.mxu0 0.0
    %467 = vmatprep.subr.mxu0 0.0
    %468 = vmatpush1.msra.mxu0 0.0
    %469 = vmatprep.subr.mxu0 0.0
    %470 = vmatpush1.msra.mxu0 0.0
    %471 = vmatprep.subr.mxu0 0.0
    %472 = vmatpush1.msra.mxu0 0.0
    %473 = vmatprep.subr.mxu0 0.0
    %474 = vmatpush1.msra.mxu0 0.0
    %475 = vmatprep.subr.mxu0 0.0
    %476 = vmatpush1.msra.mxu0 0.0
    %477 = vmatprep.subr.mxu0 0.0
    %478 = vmatpush1.msra.mxu0 0.0
    %479 = vmatprep.subr.mxu0 0.0
    %480 = vmatpush1.msra.mxu0 0.0
    %481 = vmatprep.subr.mxu0 0.0
    %482 = vmatpush1.msra.mxu0 0.0
    %483 = vmatprep.subr.mxu0 0.0
    %484 = vmatpush1.msra.mxu0 0.0
    %485 = vmatprep.subr.mxu0 0.0
    %486 = vmatpush1.msra.mxu0 0.0
    %487 = vmatprep.subr.mxu0 0.0
    %488 = vmatpush1.msra.mxu0 0.0
    %489 = vmatprep.subr.mxu0 0.0
    %490 = vmatpush1.msra.mxu0 0.0
    %491 = vmatprep.subr.mxu0 0.0
    %492 = vmatpush1.msra.mxu0 0.0
    %493 = vmatprep.subr.mxu0 0.0
    %494 = vmatpush1.msra.mxu0 0.0
    %495 = vmatprep.subr.mxu0 0.0
    %496 = vmatpush1.msra.mxu0 0.0
    %497 = vmatprep.subr.mxu0 0.0
    %498 = vmatpush1.msra.mxu0 0.0
    %499 = vmatprep.subr.mxu0 0.0
    %500 = vmatpush1.msra.mxu0 0.0
    %501 = vmatprep.subr.mxu0 0.0
    %502 = vmatpush1.msra.mxu0 0.0
    %503 = vmatprep.mubr.f32.mxu0 0.0
    %504 = vmatmul.mubr.f32.gmra.mrb[0].mxu0 %v237
    %v505 = vpop.f32.mrb[0].mxu0
    %v506 = vadd.f32 0.0, %v505
    %v507 = vpop.f32.mrb[0].mxu0
    %508 = vmatprep.mubr.f32.mxu0 0.0
    %509 = vmatmul.mubr.f32.gmra.mrb[0].mxu0 %v240
    %v510 = vpop.f32.mrb[0].mxu0
    %v511 = vadd.f32 0.0, %v510
    %v512 = vpop.f32.mrb[0].mxu0
    %513 = vmatprep.mubr.f32.mxu0 0.0
    %514 = vmatmul.mubr.f32.gmra.mrb[0].mxu0 %v243
    %v515 = vpop.f32.mrb[0].mxu0
    %v516 = vadd.f32 0.0, %v515
    %v517 = vpop.f32.mrb[0].mxu0
    %518 = vmatprep.mubr.f32.mxu0 0.0
    %519 = vmatmul.mubr.f32.gmra.mrb[0].mxu0 %v434
    %v520 = vpop.f32.mrb[0].mxu0
    %v521 = vadd.f32 0.0, %v520
    %v522 = vpop.f32.mrb[0].mxu0
    %523 = vdwg.mxu0
    %v524 = vadd.f32 %v407, %v506
    %v525 = vadd.f32 %v412, %v511
    %v526 = vadd.f32 %v417, %v516
    %v527 = vadd.f32 %v422, %v521
    %s528 = scalar_lea.vmem %s2, 168
    %v529 = vld [vmem:[%s528] sm:$0xff]
    %v530 = vld [vmem:[%s528 + $0x8] sm:$0xff]
    %v531 = vld [vmem:[%s528 + $0x10] sm:$0xff]
    %v532 = vld [vmem:[%s528 + $0x18] sm:$0xff]
    %v533 = vld [vmem:[%s528 + $0x20] sm:$0xff]
    %v534 = vld [vmem:[%s528 + $0x28] sm:$0xff]
    %v535 = vld [vmem:[%s528 + $0x30] sm:$0x3]
    %v537 = vsel %vm232, %v209, 0
    %v540 = vsel %vm245, %v535, 0
    %542 = vmatprep.subr.mxu0 0.0
    %543 = vmatpush1.msra.mxu0 %v529
    %544 = vmatprep.subr.mxu0 0.0
    %545 = vmatpush1.msra.mxu0 %v530
    %546 = vmatprep.subr.mxu0 0.0
    %547 = vmatpush1.msra.mxu0 %v531
    %548 = vmatprep.subr.mxu0 0.0
    %549 = vmatpush1.msra.mxu0 %v532
    %550 = vmatprep.subr.mxu0 0.0
    %551 = vmatpush1.msra.mxu0 %v533
    %552 = vmatprep.subr.mxu0 0.0
    %553 = vmatpush1.msra.mxu0 %v534
    %554 = vmatprep.subr.mxu0 0.0
    %555 = vmatpush1.msra.mxu0 %v540
    %556 = vmatprep.subr.mxu0 0.0
    %557 = vmatpush1.msra.mxu0 0.0
    %558 = vmatprep.subr.mxu0 0.0
    %559 = vmatpush1.msra.mxu0 0.0
    %560 = vmatprep.subr.mxu0 0.0
    %561 = vmatpush1.msra.mxu0 0.0
    %562 = vmatprep.subr.mxu0 0.0
    %563 = vmatpush1.msra.mxu0 0.0
    %564 = vmatprep.subr.mxu0 0.0
    %565 = vmatpush1.msra.mxu0 0.0
    %566 = vmatprep.subr.mxu0 0.0
    %567 = vmatpush1.msra.mxu0 0.0
    %568 = vmatprep.subr.mxu0 0.0
    %569 = vmatpush1.msra.mxu0 0.0
    %570 = vmatprep.subr.mxu0 0.0
    %571 = vmatpush1.msra.mxu0 0.0
    %572 = vmatprep.subr.mxu0 0.0
    %573 = vmatpush1.msra.mxu0 0.0
    %574 = vmatprep.subr.mxu0 0.0
    %575 = vmatpush1.msra.mxu0 0.0
    %576 = vmatprep.subr.mxu0 0.0
    %577 = vmatpush1.msra.mxu0 0.0
    %578 = vmatprep.subr.mxu0 0.0
    %579 = vmatpush1.msra.mxu0 0.0
    %580 = vmatprep.subr.mxu0 0.0
    %581 = vmatpush1.msra.mxu0 0.0
    %582 = vmatprep.subr.mxu0 0.0
    %583 = vmatpush1.msra.mxu0 0.0
    %584 = vmatprep.subr.mxu0 0.0
    %585 = vmatpush1.msra.mxu0 0.0
    %586 = vmatprep.subr.mxu0 0.0
    %587 = vmatpush1.msra.mxu0 0.0
    %588 = vmatprep.subr.mxu0 0.0
    %589 = vmatpush1.msra.mxu0 0.0
    %590 = vmatprep.subr.mxu0 0.0
    %591 = vmatpush1.msra.mxu0 0.0
    %592 = vmatprep.subr.mxu0 0.0
    %593 = vmatpush1.msra.mxu0 0.0
    %594 = vmatprep.subr.mxu0 0.0
    %595 = vmatpush1.msra.mxu0 0.0
    %596 = vmatprep.subr.mxu0 0.0
    %597 = vmatpush1.msra.mxu0 0.0
    %598 = vmatprep.subr.mxu0 0.0
    %599 = vmatpush1.msra.mxu0 0.0
    %600 = vmatprep.subr.mxu0 0.0
    %601 = vmatpush1.msra.mxu0 0.0
    %602 = vmatprep.subr.mxu0 0.0
    %603 = vmatpush1.msra.mxu0 0.0
    %604 = vmatprep.subr.mxu0 0.0
    %605 = vmatpush1.msra.mxu0 0.0
    %606 = vmatprep.mubr.f32.mxu0 0.0
    %607 = vmatmul.mubr.f32.gmra.mrb[0].mxu0 %v240
    %v608 = vpop.f32.mrb[0].mxu0
    %v609 = vadd.f32 0.0, %v608
    %v610 = vpop.f32.mrb[0].mxu0
    %611 = vmatprep.mubr.f32.mxu0 0.0
    %612 = vmatmul.mubr.f32.gmra.mrb[0].mxu0 %v243
    %v613 = vpop.f32.mrb[0].mxu0
    %v614 = vadd.f32 0.0, %v613
    %v615 = vpop.f32.mrb[0].mxu0
    %616 = vmatprep.mubr.f32.mxu0 0.0
    %617 = vmatmul.mubr.f32.gmra.mrb[0].mxu0 %v434
    %v618 = vpop.f32.mrb[0].mxu0
    %v619 = vadd.f32 0.0, %v618
    %v620 = vpop.f32.mrb[0].mxu0
    %621 = vmatprep.mubr.f32.mxu0 0.0
    %622 = vmatmul.mubr.f32.gmra.mrb[0].mxu0 %v537
    %v623 = vpop.f32.mrb[0].mxu0
    %v624 = vadd.f32 0.0, %v623
    %v625 = vpop.f32.mrb[0].mxu0
    %626 = vdwg.mxu0
    %v627 = vadd.f32 %v524, %v609
    %v628 = vadd.f32 %v525, %v614
    %v629 = vadd.f32 %v526, %v619
    %v630 = vadd.f32 %v527, %v624
    %s631 = scalar_lea.vmem %s2, 224
    %v632 = vld [vmem:[%s631] sm:$0xff]
    %v633 = vld [vmem:[%s631 + $0x8] sm:$0xff]
    %v634 = vld [vmem:[%s631 + $0x10] sm:$0xff]
    %v635 = vld [vmem:[%s631 + $0x18] sm:$0xff]
    %v636 = vld [vmem:[%s631 + $0x20] sm:$0xff]
    %v637 = vld [vmem:[%s631 + $0x28] sm:$0xff]
    %v638 = vld [vmem:[%s631 + $0x30] sm:$0x3]
    %v640 = vsel %vm232, %v214, 0
    %v643 = vsel %vm245, %v638, 0
    %645 = vmatprep.subr.mxu0 0.0
    %646 = vmatpush1.msra.mxu0 %v632
    %647 = vmatprep.subr.mxu0 0.0
    %648 = vmatpush1.msra.mxu0 %v633
    %649 = vmatprep.subr.mxu0 0.0
    %650 = vmatpush1.msra.mxu0 %v634
    %651 = vmatprep.subr.mxu0 0.0
    %652 = vmatpush1.msra.mxu0 %v635
    %653 = vmatprep.subr.mxu0 0.0
    %654 = vmatpush1.msra.mxu0 %v636
    %655 = vmatprep.subr.mxu0 0.0
    %656 = vmatpush1.msra.mxu0 %v637
    %657 = vmatprep.subr.mxu0 0.0
    %658 = vmatpush1.msra.mxu0 %v643
    %659 = vmatprep.subr.mxu0 0.0
    %660 = vmatpush1.msra.mxu0 0.0
    %661 = vmatprep.subr.mxu0 0.0
    %662 = vmatpush1.msra.mxu0 0.0
    %663 = vmatprep.subr.mxu0 0.0
    %664 = vmatpush1.msra.mxu0 0.0
    %665 = vmatprep.subr.mxu0 0.0
    %666 = vmatpush1.msra.mxu0 0.0
    %667 = vmatprep.subr.mxu0 0.0
    %668 = vmatpush1.msra.mxu0 0.0
    %669 = vmatprep.subr.mxu0 0.0
    %670 = vmatpush1.msra.mxu0 0.0
    %671 = vmatprep.subr.mxu0 0.0
    %672 = vmatpush1.msra.mxu0 0.0
    %673 = vmatprep.subr.mxu0 0.0
    %674 = vmatpush1.msra.mxu0 0.0
    %675 = vmatprep.subr.mxu0 0.0
    %676 = vmatpush1.msra.mxu0 0.0
    %677 = vmatprep.subr.mxu0 0.0
    %678 = vmatpush1.msra.mxu0 0.0
    %679 = vmatprep.subr.mxu0 0.0
    %680 = vmatpush1.msra.mxu0 0.0
    %681 = vmatprep.subr.mxu0 0.0
    %682 = vmatpush1.msra.mxu0 0.0
    %683 = vmatprep.subr.mxu0 0.0
    %684 = vmatpush1.msra.mxu0 0.0
    %685 = vmatprep.subr.mxu0 0.0
    %686 = vmatpush1.msra.mxu0 0.0
    %687 = vmatprep.subr.mxu0 0.0
    %688 = vmatpush1.msra.mxu0 0.0
    %689 = vmatprep.subr.mxu0 0.0
    %690 = vmatpush1.msra.mxu0 0.0
    %691 = vmatprep.subr.mxu0 0.0
    %692 = vmatpush1.msra.mxu0 0.0
    %693 = vmatprep.subr.mxu0 0.0
    %694 = vmatpush1.msra.mxu0 0.0
    %695 = vmatprep.subr.mxu0 0.0
    %696 = vmatpush1.msra.mxu0 0.0
    %697 = vmatprep.subr.mxu0 0.0
    %698 = vmatpush1.msra.mxu0 0.0
    %699 = vmatprep.subr.mxu0 0.0
    %700 = vmatpush1.msra.mxu0 0.0
    %701 = vmatprep.subr.mxu0 0.0
    %702 = vmatpush1.msra.mxu0 0.0
    %703 = vmatprep.subr.mxu0 0.0
    %704 = vmatpush1.msra.mxu0 0.0
    %705 = vmatprep.subr.mxu0 0.0
    %706 = vmatpush1.msra.mxu0 0.0
    %707 = vmatprep.subr.mxu0 0.0
    %708 = vmatpush1.msra.mxu0 0.0
    %709 = vmatprep.mubr.f32.mxu0 0.0
    %710 = vmatmul.mubr.f32.gmra.mrb[0].mxu0 %v243
    %v711 = vpop.f32.mrb[0].mxu0
    %v712 = vadd.f32 0.0, %v711
    %v713 = vpop.f32.mrb[0].mxu0
    %714 = vmatprep.mubr.f32.mxu0 0.0
    %715 = vmatmul.mubr.f32.gmra.mrb[0].mxu0 %v434
    %v716 = vpop.f32.mrb[0].mxu0
    %v717 = vadd.f32 0.0, %v716
    %v718 = vpop.f32.mrb[0].mxu0
    %719 = vmatprep.mubr.f32.mxu0 0.0
    %720 = vmatmul.mubr.f32.gmra.mrb[0].mxu0 %v537
    %v721 = vpop.f32.mrb[0].mxu0
    %v722 = vadd.f32 0.0, %v721
    %v723 = vpop.f32.mrb[0].mxu0
    %724 = vmatprep.mubr.f32.mxu0 0.0
    %725 = vmatmul.mubr.f32.gmra.mrb[0].mxu0 %v640
    %v726 = vpop.f32.mrb[0].mxu0
    %v727 = vadd.f32 0.0, %v726
    %v728 = vpop.f32.mrb[0].mxu0
    %729 = vdwg.mxu0
    %v730 = vadd.f32 %v627, %v712
    %v731 = vadd.f32 %v628, %v717
    %v732 = vadd.f32 %v629, %v722
    %v733 = vadd.f32 %v630, %v727
    %v734 = vld [vmem:[%s4] sm:$0x1]
    %v736 = vlaneseq
    %v737 = vshrl.u32 %v736, 7
    %v738 = vsub.s32 0, %v737
    %v739 = vrot.slane %v734, %v738
    %v741 = vadd.f32 %v730, %v739
    %v742 = vadd.f32 %v731, %v739
    %v743 = vadd.f32 %v732, %v739
    %v744 = vadd.f32 %v733, %v739
    %v745 = vmax.f32 %v741, 0.0
    %v746 = vmax.f32 %v742, 0.0
    %v747 = vmax.f32 %v743, 0.0
    %v748 = vmax.f32 %v744, 0.0
    %v749 = vmax.f32 %v745, %v746
    %v750 = vmax.f32 %v749, %v747
    %v751 = vmax.f32 %v750, %v748
    %v752 = vld [vmem:[%s3] sm:$0xff]
    %v753 = vld [vmem:[%s3 + $0x8] sm:$0xff]
    %v754 = vld [vmem:[%s3 + $0x10] sm:$0xff]
    %v755 = vld [vmem:[%s3 + $0x18] sm:$0xff]
    %756 = vrot.lane.b32.xlu0 %v739, 96
    %v757 = vpop.permute.xlu0 %756
    %vm759 = vcmask 261120
    %v761 = vsel %vm759, %v751, 0
    %763 = vmatprep.subr.mxu0 0.0
    %764 = vmatpush1.msra.mxu0 %v752
    %765 = vmatprep.subr.mxu0 0.0
    %766 = vmatpush1.msra.mxu0 %v753
    %767 = vmatprep.subr.mxu0 0.0
    %768 = vmatpush1.msra.mxu0 %v754
    %769 = vmatprep.subr.mxu0 0.0
    %770 = vmatpush1.msra.mxu0 %v755
    %771 = vmatprep.subr.mxu0 0.0
    %772 = vmatpush1.msra.mxu0 0.0
    %773 = vmatprep.subr.mxu0 0.0
    %774 = vmatpush1.msra.mxu0 0.0
    %775 = vmatprep.subr.mxu0 0.0
    %776 = vmatpush1.msra.mxu0 0.0
    %777 = vmatprep.subr.mxu0 0.0
    %778 = vmatpush1.msra.mxu0 0.0
    %779 = vmatprep.subr.mxu0 0.0
    %780 = vmatpush1.msra.mxu0 0.0
    %781 = vmatprep.subr.mxu0 0.0
    %782 = vmatpush1.msra.mxu0 0.0
    %783 = vmatprep.subr.mxu0 0.0
    %784 = vmatpush1.msra.mxu0 0.0
    %785 = vmatprep.subr.mxu0 0.0
    %786 = vmatpush1.msra.mxu0 0.0
    %787 = vmatprep.subr.mxu0 0.0
    %788 = vmatpush1.msra.mxu0 0.0
    %789 = vmatprep.subr.mxu0 0.0
    %790 = vmatpush1.msra.mxu0 0.0
    %791 = vmatprep.subr.mxu0 0.0
    %792 = vmatpush1.msra.mxu0 0.0
    %793 = vmatprep.subr.mxu0 0.0
    %794 = vmatpush1.msra.mxu0 0.0
    %795 = vmatprep.subr.mxu0 0.0
    %796 = vmatpush1.msra.mxu0 0.0
    %797 = vmatprep.subr.mxu0 0.0
    %798 = vmatpush1.msra.mxu0 0.0
    %799 = vmatprep.subr.mxu0 0.0
    %800 = vmatpush1.msra.mxu0 0.0
    %801 = vmatprep.subr.mxu0 0.0
    %802 = vmatpush1.msra.mxu0 0.0
    %803 = vmatprep.subr.mxu0 0.0
    %804 = vmatpush1.msra.mxu0 0.0
    %805 = vmatprep.subr.mxu0 0.0
    %806 = vmatpush1.msra.mxu0 0.0
    %807 = vmatprep.subr.mxu0 0.0
    %808 = vmatpush1.msra.mxu0 0.0
    %809 = vmatprep.subr.mxu0 0.0
    %810 = vmatpush1.msra.mxu0 0.0
    %811 = vmatprep.subr.mxu0 0.0
    %812 = vmatpush1.msra.mxu0 0.0
    %813 = vmatprep.subr.mxu0 0.0
    %814 = vmatpush1.msra.mxu0 0.0
    %815 = vmatprep.subr.mxu0 0.0
    %816 = vmatpush1.msra.mxu0 0.0
    %817 = vmatprep.subr.mxu0 0.0
    %818 = vmatpush1.msra.mxu0 0.0
    %819 = vmatprep.subr.mxu0 0.0
    %820 = vmatpush1.msra.mxu0 0.0
    %821 = vmatprep.subr.mxu0 0.0
    %822 = vmatpush1.msra.mxu0 0.0
    %823 = vmatprep.subr.mxu0 0.0
    %824 = vmatpush1.msra.mxu0 0.0
    %825 = vmatprep.subr.mxu0 0.0
    %826 = vmatpush1.msra.mxu0 0.0
    %827 = vmatprep.mubr.f32.mxu0 0.0
    %828 = vmatmul.mubr.f32.gmra.mrb[0].mxu0 %v761
    %v829 = vpop.f32.mrb[0].mxu0
    %v830 = vadd.f32 %v757, %v829
    %v831 = vpop.f32.mrb[0].mxu0
    %832 = vdwg.mxu0
    %v833 = vmax.f32 %v830, 0.0
    %v834 = vsub.f32 0.0, %v830
    %v835 = vmul.f32 %v834, 1.442695
    %v836 = vpow.pop %v835
    %v837 = vadd.f32 %v836, 1.0
    %v838 = vrcp.pop %v837
    %v839 = vmul.f32 1.0, %v838
    %841 = vrot.lane.b32.xlu0 %v833, 32
    %v842 = vpop.permute.xlu0 %841
    %v844 = vmul.f32 %v839, %v842
    %v845 = vsub.f32 1.0, %v839
    %846 = vrot.lane.b32.xlu0 %v751, 32
    %v847 = vpop.permute.xlu0 %846
    %v849 = vmul.f32 %v845, %v847
    %v850 = vadd.f32 %v844, %v849
    %852 = vrot.lane.b32.xlu0 %v850, 96
    %v853 = vpop.permute.xlu0 %852
    %855 = vst.msk [vmem:[#allocation2] sm:$0xff] %vm759, %v853
    // Predicated region
    $region22: #{model_embeddings_forward.1} parent=1 // pred_check
      _
    $region23: #{model_embeddings_forward.1} parent=1 // pred_check_branch
      %857 = sbr.rel (0) target = $region25
    $region24: #{model_embeddings_forward.1} parent=1 // pred_region
      %s859 = ssub.s32 128, 128
      %860 = vsyncadd [#allocation3], %s859
      %s862 = sshll.u32 [#allocation2], 4
      %s863 = int_to_ptr.vmem [resolvable:$true] %s862
      %865 = dma.vmem_to_hbm [thread:$0]  %s863, 128, %s5, [#allocation3]
    $region25: #{model_embeddings_forward.1} parent=1 // pred_fallthru
      _
    // Predicated region
    $region26: #{model_embeddings_forward.1} parent=1 // pred_check
      _
    $region27: #{model_embeddings_forward.1} parent=1 // pred_check_branch
      %867 = sbr.rel (0) target = $region29
    $region28: #{model_embeddings_forward.1} parent=1 // pred_region
      %868 = dma.done [#allocation3], 128
    $region29: #{model_embeddings_forward.1} parent=1 // pred_fallthru
      _
    %869 = vsyncpa [#allocation3], 1

</llo_original>
